<compile_context>
chip_gen: v6e
topology: v6e:2x2x1
jax: 0.10.0
libtpu: 0.0.40
codegen_flags: <defaults>
</compile_context>

<pallas_src>
import functools

import jax
import jax.numpy as jnp
from jax.experimental import pallas as pl
from jax.experimental.pallas import tpu as pltpu


def _cross_entropy_kernel(x_ref, t_ref, loss_ref, m_ref, s_ref, tgt_ref, *,
                          batch, num_classes):
    """Online-softmax cross-entropy over a 2-D grid (batch tiles x class chunks)."""
    i = pl.program_id(0)                  # batch-tile index (parallel)
    j = pl.program_id(1)                  # class-chunk index (reduction axis, last)
    nj = pl.num_programs(1)

    tb, tc = x_ref.shape                  # static tile sizes

    # ---- init running per-row state at the first class chunk of every batch tile ----
    @pl.when(j == 0)
    def _():
        m_ref[...] = jnp.full((tb, 1), -jnp.inf, dtype=jnp.float32)
        s_ref[...] = jnp.zeros((tb, 1), dtype=jnp.float32)
        tgt_ref[...] = jnp.zeros((tb, 1), dtype=jnp.float32)

    x = x_ref[...]                        # (tb, tc), input dtype (bf16 stays bf16)

    # Chunk-local class indices: compile-time constant iota; the chunk offset is folded
    # into the per-row scalar side (t - j*tc) and the scalar mask limit instead of a
    # full-width per-element add.
    col_local = jax.lax.broadcasted_iota(jnp.int32, (tb, tc), 1)
    t_local = t_ref[...] - j * tc         # (tb, 1) int32

    if num_classes % tc != 0:             # static guard: only mask a padded last chunk
        limit = num_classes - j * tc      # scalar
        x = jnp.where(col_local < limit, x, jnp.array(-jnp.inf, dtype=x.dtype))

    # ---- online logsumexp update (state in f32; promote to f32 only at exp) ----
    m_prev = m_ref[...]
    chunk_max = jnp.max(x, axis=-1, keepdims=True).astype(jnp.float32)   # (tb, 1)
    m_new = jnp.maximum(m_prev, chunk_max)
    p_sum = jnp.sum(jnp.exp(x - m_new), axis=-1, keepdims=True)          # (tb, 1) f32
    s_ref[...] = s_ref[...] * jnp.exp(m_prev - m_new) + p_sum
    m_ref[...] = m_new

    # ---- fused target-logit extraction (no one-hot materialization) ----
    tgt_chunk = jnp.sum(jnp.where(col_local == t_local, x, jnp.zeros_like(x)),
                        axis=-1, keepdims=True)                          # input dtype
    tgt_ref[...] = tgt_ref[...] + tgt_chunk.astype(jnp.float32)

    # ---- finalize this batch tile at the last class chunk: write its partial sum ----
    @pl.when(j == nj - 1)
    def _():
        per_ex = m_ref[...] + jnp.log(s_ref[...]) - tgt_ref[...]         # (tb, 1) f32
        if batch % tb != 0:               # static guard: mask rows padded past true B
            row = jax.lax.broadcasted_iota(jnp.int32, (tb, 1), 0) + i * tb
            per_ex = jnp.where(row < batch, per_ex, jnp.zeros_like(per_ex))
        tile_sum = jnp.sum(per_ex, axis=0, keepdims=True)                # (1, 1)
        loss_ref[...] = jnp.broadcast_to(tile_sum.reshape(1, 1, 1), loss_ref.shape)


def cross_entropy_pallas(inputs, targets, *, tb=None, tc=None):
    """inputs: (B, C) float logits; targets: (B,) integer labels. Returns scalar f32."""
    B, C = inputs.shape
    itemsize = jnp.dtype(inputs.dtype).itemsize
    # Minimum packed sublane tile: f32 -> 8, bf16/f16 -> 16, int8/fp8 -> 32.
    sub = max(8, 32 // max(itemsize, 1))

    # --- class-chunk size: full C when moderate, otherwise stream in 4096-lane chunks ---
    if tc is None:
        tc = C if C <= 8192 else 4096     # multiple of 128
    if tc >= C:
        tc = C                            # block dim == full array dim is always legal

    # --- batch-tile size: ~4 MiB of logits per pipeline buffer, dtype-aligned rows ---
    if tb is None:
        rows = (4 * 1024 * 1024) // max(tc * itemsize, 1)
        tb = max(sub, min(1024, (rows // sub) * sub))
    if tb >= B:
        tb = B                            # block dim == full array dim is always legal
    else:
        tb = max(sub, (tb // sub) * sub)  # keep sublane counts packed-tile aligned

    ni = pl.cdiv(B, tb)
    nj = pl.cdiv(C, tc)
    targets_2d = targets.astype(jnp.int32).reshape(B, 1)

    kernel = functools.partial(_cross_entropy_kernel, batch=B, num_classes=C)

    # VMEM budget: double-buffered logits chunk + targets tile + scratch + per-tile output
    # block, with headroom; capped at 48 MiB so headroom remains on v7x (64 MiB physical).
    vmem_bytes = 2 * tb * tc * itemsize           # logits chunk, double-buffered
    vmem_bytes += 2 * tb * 128 * 4                # targets tile (lane-padded), x2 buffers
    vmem_bytes += 3 * tb * 128 * 4                # m / s / tgt scratch (lane-padded)
    vmem_bytes += 2 * 8 * 128 * 4                 # (1,8,128) partial-sum output block
    vmem_limit = int(min(max(2 * vmem_bytes, 16 << 20), 48 << 20))

    partials = pl.pallas_call(
        kernel,
        # Per-batch-tile partial sums (lane/sublane dense (8,128) blocks) so the batch
        # axis can be megacore-parallel; all elements of row i hold the same tile sum.
        out_shape=jax.ShapeDtypeStruct((ni, 8, 128), jnp.float32),
        grid=(ni, nj),
        in_specs=[
            pl.BlockSpec((tb, tc), lambda i, j: (i, j)),   # logits chunk
            pl.BlockSpec((tb, 1), lambda i, j: (i, 0)),    # per-tile targets slice
        ],
        out_specs=pl.BlockSpec((1, 8, 128), lambda i, j: (i, 0, 0)),
        scratch_shapes=[
            pltpu.VMEM((tb, 1), jnp.float32),   # running max
            pltpu.VMEM((tb, 1), jnp.float32),   # running sum-exp
            pltpu.VMEM((tb, 1), jnp.float32),   # running target logit
        ],
        compiler_params=pltpu.CompilerParams(
            dimension_semantics=("parallel", "arbitrary"),
            vmem_limit_bytes=vmem_limit,
        ),
    )(inputs, targets_2d)

    # Mean reduction (and cross-tile accumulation) outside the kernel in f32.
    return jnp.sum(partials[:, 0, 0]) / jnp.float32(B)


def _reference(logits, labels):
    logp = jax.nn.log_softmax(logits.astype(jnp.float32), axis=-1)
    return -jnp.mean(jnp.take_along_axis(logp, labels[:, None].astype(jnp.int32), axis=-1))


if __name__ == "__main__":
    key = jax.random.PRNGKey(0)
    k1, k2 = jax.random.split(key)

    # Small shapes consistent with the module: (batch_size, num_classes) logits, (B,) labels.
    B, C = 8, 32
    logits = jax.random.normal(k1, (B, C), dtype=jnp.float32)
    labels = jax.random.randint(k2, (B,), 0, C, dtype=jnp.int32)

    loss = cross_entropy_pallas(logits, labels)
    jax.block_until_ready(loss)
    ref = _reference(logits, labels)
    assert jnp.allclose(loss, ref, atol=1e-5, rtol=1e-5), (loss, ref)

    # Exercise the tiled paths at small scale:
    #  - multiple batch tiles with a padded (masked) last tile,
    #  - multiple class chunks with a padded (masked) last chunk (online logsumexp).
    B2, C2 = 20, 160
    logits2 = jax.random.normal(k1, (B2, C2), dtype=jnp.float32)
    labels2 = jax.random.randint(k2, (B2,), 0, C2, dtype=jnp.int32)
    ref2 = _reference(logits2, labels2)

    loss2 = cross_entropy_pallas(logits2, labels2, tb=8)
    jax.block_until_ready(loss2)
    assert jnp.allclose(loss2, ref2, atol=1e-5, rtol=1e-5), (loss2, ref2)

    loss3 = cross_entropy_pallas(logits2, labels2, tb=8, tc=128)
    jax.block_until_ready(loss3)
    assert jnp.allclose(loss3, ref2, atol=1e-5, rtol=1e-5), (loss3, ref2)

    # bf16 logits: exercises dtype-aware sublane alignment (tb multiple of 16) and the
    # masked last chunk / last batch tile with bf16 streaming.
    B3, C3 = 24, 200
    logits3 = jax.random.normal(k1, (B3, C3), dtype=jnp.float32).astype(jnp.bfloat16)
    labels3 = jax.random.randint(k2, (B3,), 0, C3, dtype=jnp.int32)
    ref3 = _reference(logits3, labels3)

    loss4 = cross_entropy_pallas(logits3, labels3, tb=16, tc=128)
    jax.block_until_ready(loss4)
    assert jnp.allclose(loss4, ref3, atol=1e-3, rtol=1e-3), (loss4, ref3)

    print("KERNEL_OK")
</pallas_src>

<mosaic_0001>
module attributes {stable_mosaic.version = 11 : i64} {
  func.func @_cross_entropy_kernel(%arg0: i32, %arg1: i32, %arg2: memref<8x32xf32, #tpu.memory_space<vmem>>, %arg3: memref<8x1xi32, #tpu.memory_space<vmem>>, %arg4: memref<1x8x128xf32, #tpu.memory_space<vmem>>, %arg5: memref<8x1xf32, #tpu.memory_space<vmem>>, %arg6: memref<8x1xf32, #tpu.memory_space<vmem>>, %arg7: memref<8x1xf32, #tpu.memory_space<vmem>>) attributes {dimension_semantics = [#tpu.dimension_semantics<parallel>, #tpu.dimension_semantics<arbitrary>], iteration_bounds = array<i64: 1, 1>, scalar_prefetch = 0 : i64, scratch_operands = 3 : i64, tpu.core_type = #tpu.core_type<tc>, window_params = [{transform_indices = @transform_0, window_bounds = array<i64: 8, 32>}, {transform_indices = @transform_1, window_bounds = array<i64: 8, 1>}, {transform_indices = @transform_2, window_bounds = array<i64: 1, 8, 128>}]} {
    %c0_i32 = arith.constant 0 : i32
    %0 = arith.cmpi eq, %arg1, %c0_i32 : i32
    %1 = arith.extui %0 : i1 to i32
    %c0_i32_0 = arith.constant 0 : i32
    %2 = arith.cmpi ne, %1, %c0_i32_0 : i32
    scf.if %2 {
      %cst_21 = arith.constant 0xFF800000 : f32
      %37 = vector.broadcast %cst_21 : f32 to vector<8x1xf32>
      %c0_22 = arith.constant 0 : index
      %c0_23 = arith.constant 0 : index
      %38 = vector.load %arg5[%c0_22, %c0_23] : memref<8x1xf32, #tpu.memory_space<vmem>>, vector<8x1xf32>
      tpu.vector_store %arg5[%c0_22, %c0_23], %37 {strides = array<i32>} : memref<8x1xf32, #tpu.memory_space<vmem>>, vector<8x1xf32>,
      %cst_24 = arith.constant 0.000000e+00 : f32
      %39 = vector.broadcast %cst_24 : f32 to vector<8x1xf32>
      %c0_25 = arith.constant 0 : index
      %c0_26 = arith.constant 0 : index
      %40 = vector.load %arg6[%c0_25, %c0_26] : memref<8x1xf32, #tpu.memory_space<vmem>>, vector<8x1xf32>
      tpu.vector_store %arg6[%c0_25, %c0_26], %39 {strides = array<i32>} : memref<8x1xf32, #tpu.memory_space<vmem>>, vector<8x1xf32>,
      %cst_27 = arith.constant 0.000000e+00 : f32
      %41 = vector.broadcast %cst_27 : f32 to vector<8x1xf32>
      %c0_28 = arith.constant 0 : index
      %c0_29 = arith.constant 0 : index
      %42 = vector.load %arg7[%c0_28, %c0_29] : memref<8x1xf32, #tpu.memory_space<vmem>>, vector<8x1xf32>
      tpu.vector_store %arg7[%c0_28, %c0_29], %41 {strides = array<i32>} : memref<8x1xf32, #tpu.memory_space<vmem>>, vector<8x1xf32>,
    } else {
    }
    %c0 = arith.constant 0 : index
    %c0_1 = arith.constant 0 : index
    %3 = vector.load %arg2[%c0, %c0_1] : memref<8x32xf32, #tpu.memory_space<vmem>>, vector<8x32xf32>
    %4 = tpu.iota {dimensions = array<i32: 1>} : vector<8x32xi32>
    %c0_2 = arith.constant 0 : index
    %c0_3 = arith.constant 0 : index
    %5 = vector.load %arg3[%c0_2, %c0_3] : memref<8x1xi32, #tpu.memory_space<vmem>>, vector<8x1xi32>
    %c32_i32 = arith.constant 32 : i32
    %6 = arith.muli %arg1, %c32_i32 : i32
    %7 = vector.broadcast %6 : i32 to vector<8x1xi32>
    %8 = arith.subi %5, %7 : vector<8x1xi32>
    %c0_4 = arith.constant 0 : index
    %c0_5 = arith.constant 0 : index
    %9 = vector.load %arg5[%c0_4, %c0_5] : memref<8x1xf32, #tpu.memory_space<vmem>>, vector<8x1xf32>
    %cst = arith.constant dense<0xFF800000> : vector<8xf32>
    %10 = vector.multi_reduction <maximumf>, %3, %cst [1] : vector<8x32xf32> to vector<8xf32>
    %11 = vector.shape_cast %10 : vector<8xf32> to vector<8x1xf32>
    %12 = arith.maximumf %9, %11 : vector<8x1xf32>
    %13 = vector.broadcast %12 : vector<8x1xf32> to vector<8x32xf32>
    %14 = arith.subf %3, %13 : vector<8x32xf32>
    %15 = math.exp %14 : vector<8x32xf32>
    %cst_6 = arith.constant dense<0.000000e+00> : vector<8xf32>
    %16 = vector.multi_reduction <add>, %15, %cst_6 [1] : vector<8x32xf32> to vector<8xf32>
    %17 = vector.shape_cast %16 : vector<8xf32> to vector<8x1xf32>
    %c0_7 = arith.constant 0 : index
    %c0_8 = arith.constant 0 : index
    %18 = vector.load %arg6[%c0_7, %c0_8] : memref<8x1xf32, #tpu.memory_space<vmem>>, vector<8x1xf32>
    %19 = arith.subf %9, %12 : vector<8x1xf32>
    %20 = math.exp %19 : vector<8x1xf32>
    %21 = arith.mulf %18, %20 : vector<8x1xf32>
    %22 = arith.addf %21, %17 : vector<8x1xf32>
    %c0_9 = arith.constant 0 : index
    %c0_10 = arith.constant 0 : index
    %23 = vector.load %arg6[%c0_9, %c0_10] : memref<8x1xf32, #tpu.memory_space<vmem>>, vector<8x1xf32>
    tpu.vector_store %arg6[%c0_9, %c0_10], %22 {strides = array<i32>} : memref<8x1xf32, #tpu.memory_space<vmem>>, vector<8x1xf32>,
    %c0_11 = arith.constant 0 : index
    %c0_12 = arith.constant 0 : index
    %24 = vector.load %arg5[%c0_11, %c0_12] : memref<8x1xf32, #tpu.memory_space<vmem>>, vector<8x1xf32>
    tpu.vector_store %arg5[%c0_11, %c0_12], %12 {strides = array<i32>} : memref<8x1xf32, #tpu.memory_space<vmem>>, vector<8x1xf32>,
    %25 = vector.broadcast %8 : vector<8x1xi32> to vector<8x32xi32>
    %26 = arith.cmpi eq, %4, %25 : vector<8x32xi32>
    %cst_13 = arith.constant 0.000000e+00 : f32
    %27 = vector.broadcast %cst_13 : f32 to vector<8x32xf32>
    %28 = arith.select %26, %3, %27 : vector<8x32xi1>, vector<8x32xf32>
    %cst_14 = arith.constant dense<0.000000e+00> : vector<8xf32>
    %29 = vector.multi_reduction <add>, %28, %cst_14 [1] : vector<8x32xf32> to vector<8xf32>
    %30 = vector.shape_cast %29 : vector<8xf32> to vector<8x1xf32>
    %c0_15 = arith.constant 0 : index
    %c0_16 = arith.constant 0 : index
    %31 = vector.load %arg7[%c0_15, %c0_16] : memref<8x1xf32, #tpu.memory_space<vmem>>, vector<8x1xf32>
    %32 = arith.addf %31, %30 : vector<8x1xf32>
    %c0_17 = arith.constant 0 : index
    %c0_18 = arith.constant 0 : index
    %33 = vector.load %arg7[%c0_17, %c0_18] : memref<8x1xf32, #tpu.memory_space<vmem>>, vector<8x1xf32>
    tpu.vector_store %arg7[%c0_17, %c0_18], %32 {strides = array<i32>} : memref<8x1xf32, #tpu.memory_space<vmem>>, vector<8x1xf32>,
    %c0_i32_19 = arith.constant 0 : i32
    %34 = arith.cmpi eq, %arg1, %c0_i32_19 : i32
    %35 = arith.extui %34 : i1 to i32
    %c0_i32_20 = arith.constant 0 : i32
    %36 = arith.cmpi ne, %35, %c0_i32_20 : i32
    scf.if %36 {
      %c0_21 = arith.constant 0 : index
      %c0_22 = arith.constant 0 : index
      %37 = vector.load %arg5[%c0_21, %c0_22] : memref<8x1xf32, #tpu.memory_space<vmem>>, vector<8x1xf32>
      %c0_23 = arith.constant 0 : index
      %c0_24 = arith.constant 0 : index
      %38 = vector.load %arg6[%c0_23, %c0_24] : memref<8x1xf32, #tpu.memory_space<vmem>>, vector<8x1xf32>
      %39 = math.log %38 : vector<8x1xf32>
      %40 = arith.addf %37, %39 : vector<8x1xf32>
      %c0_25 = arith.constant 0 : index
      %c0_26 = arith.constant 0 : index
      %41 = vector.load %arg7[%c0_25, %c0_26] : memref<8x1xf32, #tpu.memory_space<vmem>>, vector<8x1xf32>
      %42 = arith.subf %40, %41 : vector<8x1xf32>
      %cst_27 = arith.constant dense<0.000000e+00> : vector<1xf32>
      %43 = vector.multi_reduction <add>, %42, %cst_27 [0] : vector<8x1xf32> to vector<1xf32>
      %44 = vector.shape_cast %43 : vector<1xf32> to vector<1x1xf32>
      %45 = vector.shape_cast %44 : vector<1x1xf32> to vector<1x1x1xf32>
      %46 = vector.shape_cast %45 : vector<1x1x1xf32> to vector<1x1x1xf32>
      %47 = vector.broadcast %46 : vector<1x1x1xf32> to vector<1x8x128xf32>
      %c0_28 = arith.constant 0 : index
      %c0_29 = arith.constant 0 : index
      %c0_30 = arith.constant 0 : index
      %48 = vector.load %arg4[%c0_28, %c0_29, %c0_30] : memref<1x8x128xf32, #tpu.memory_space<vmem>>, vector<1x8x128xf32>
      tpu.vector_store %arg4[%c0_28, %c0_29, %c0_30], %47 {strides = array<i32>} : memref<1x8x128xf32, #tpu.memory_space<vmem>>, vector<1x8x128xf32>,
    } else {
    }
    return
  }
  func.func @transform_0(%arg0: i32, %arg1: i32) -> (i32, i32) {
    %c0_i32 = arith.constant 0 : i32
    return %arg0, %arg1 : i32, i32
  }
  func.func @transform_1(%arg0: i32, %arg1: i32) -> (i32, i32) {
    %c0_i32 = arith.constant 0 : i32
    %c0_i32_0 = arith.constant 0 : i32
    return %arg0, %c0_i32 : i32, i32
  }
  func.func @transform_2(%arg0: i32, %arg1: i32) -> (i32, i32, i32) {
    %c0_i32 = arith.constant 0 : i32
    %c0_i32_0 = arith.constant 0 : i32
    %c0_i32_1 = arith.constant 0 : i32
    return %arg0, %c0_i32, %c0_i32_0 : i32, i32, i32
  }
}

</mosaic_0001>

<llo_original>
// kernel: tpu_custom_call.1
$region0: #{tpu_custom_call.1}
  #allocation0 [shape = 'u32[]', space=smem, size = 0x4, offset = 0x4, fixed_abs, tag = 'smem constant byte address 0x4 - core index']
  #allocation1 [shape = 'u32[144,128]{1,0:T(1,128)}', space=vmem, size = 0x12000, scoped, tag = 'internal scratch']
  #allocation2 [shape = 'f32[8,1]{1,0:T(8,128)}', space=vmem, size = 0x1000, scoped, tag = 'scratch operand']
  #allocation3 [shape = 'f32[8,1]{1,0:T(8,128)}', space=vmem, size = 0x1000, scoped, tag = 'scratch operand']
  #allocation4 [shape = 'f32[8,1]{1,0:T(8,128)}', space=vmem, size = 0x1000, scoped, tag = 'scratch operand']
  %s0 = inlined_call_operand.vmem [shape: f32[8,32], index: 0, kind: input, shape index: {}]
  %s1 = inlined_call_operand.vmem [shape: s32[8,1], index: 1, kind: input, shape index: {}]
  %s2 = inlined_call_operand.hbm [shape: f32[1,8,128], index: 2, kind: output, shape index: {}]
  %s3 = sld [smem:[#allocation0]]
  $region26: #{tpu_custom_call.1} parent=0
    _
  %s5 = ssub.s32 1, %s3
  %s6 = scalar_select 0, %s5, %s3
  $region1: #{tpu_custom_call.1} parent=0
    #allocation5 [shape = 'u8[4096]{0}', space=vmem, size = 0x1000, scoped, tag = 'output window, operand 0, single buffered']
    #allocation6 [shape = 's32[1]{0}', space=sflag, size = 0x4, scoped, tag = 'scoped memory for tpu_custom_call.1']
    %7 = vsyncpa [#allocation6], 0
    // Predicated region
    $region2: #{tpu_custom_call.1} parent=1 // pred_check
      _
    $region3: #{tpu_custom_call.1} parent=1 // pred_check_branch
      %9 = sbr.rel (0) target = $region5
    $region4: #{tpu_custom_call.1} parent=1 // pred_region
      _
    $region5: #{tpu_custom_call.1} parent=1 // pred_fallthru
      _
    // Predicated region
    $region6: #{tpu_custom_call.1} parent=1 // pred_check
      _
    $region7: #{tpu_custom_call.1} parent=1 // pred_check_branch
      %11 = sbr.rel (0) target = $region9
    $region8: #{tpu_custom_call.1} parent=1 // pred_region
      _
    $region9: #{tpu_custom_call.1} parent=1 // pred_fallthru
      _
    %p12 = scmp.eq.s32.totalorder 0, 0
    // Predicated region
    $region10: #{tpu_custom_call.1} parent=1 // pred_check
      %p13 = pneg %p12
    $region11: #{tpu_custom_call.1} parent=1 // pred_check_branch
      %15 = sbr.rel (%p13) target = $region13
    $region12: #{tpu_custom_call.1} parent=1 // pred_region
      %vm16 = vcmask 7168
      %17 = vst.msk [vmem:[#allocation2] sm:$0xff] %vm16, -inf
      %18 = vst.msk [vmem:[#allocation3] sm:$0xff] %vm16, 0.0
      %19 = vst.msk [vmem:[#allocation4] sm:$0xff] %vm16, 0.0
    $region13: #{tpu_custom_call.1} parent=1 // pred_fallthru
      _
    %v20 = vld [vmem:[%s0] sm:$0xff]
    %v21 = vlaneseq
    %v22 = vand.u32 %v21, 127
    %v23 = vld [vmem:[%s1] sm:$0xff]
    %s24 = smul.u32 0, 32
    %v25 = vstv %s24
    %v26 = vsub.s32 %v23, %v25
    %v27 = vld [vmem:[#allocation2] sm:$0xff]
    %vm28 = vcmask 261120
    %v29 = vsel %vm28, %v20, -inf
    %30 = vmax.xlane.f32.xlu0 %v29
    %v31 = vpop.xlane.xlu0 %30
    %v32 = vmax.f32 %v27, %v31
    %34 = vset.pattern.permute.xlu0 0
    %35 = vperm.xlu0 %34, %v32
    %v36 = vpop.permute.xlu0 %35
    %v38 = vsub.f32 %v20, %v36
    %v39 = vmul.f32 %v38, 1.442695
    %v40 = vpow.pop %v39
    %v41 = vsel %vm28, %v40, 0.0
    %42 = vadd.xlane.f32.xlu0 %v41
    %v43 = vpop.xlane.xlu0 %42
    %v44 = vld [vmem:[#allocation3] sm:$0xff]
    %v45 = vsub.f32 %v27, %v32
    %v46 = vmul.f32 %v45, 1.442695
    %v47 = vpow.pop %v46
    %v48 = vmul.f32 %v44, %v47
    %v49 = vadd.f32 %v48, %v43
    %vm50 = vcmask 7168
    %51 = vst.msk [vmem:[#allocation3] sm:$0xff] %vm50, %v49
    %52 = vst.msk [vmem:[#allocation2] sm:$0xff] %vm50, %v32
    %53 = vset.pattern.permute.xlu0 0
    %54 = vperm.xlu0 %53, %v26
    %v55 = vpop.permute.xlu0 %54
    %vm56 = vcmp.eq.s32.totalorder %v22, %v55
    %v57 = vsel %vm56, %v20, 0.0
    %v58 = vsel %vm28, %v57, 0.0
    %59 = vadd.xlane.f32.xlu0 %v58
    %v60 = vpop.xlane.xlu0 %59
    %v61 = vld [vmem:[#allocation4] sm:$0xff]
    %v62 = vadd.f32 %v61, %v60
    %63 = vst.msk [vmem:[#allocation4] sm:$0xff] %vm50, %v62
    // Predicated region
    $region14: #{tpu_custom_call.1} parent=1 // pred_check
      %p64 = pneg %p12
    $region15: #{tpu_custom_call.1} parent=1 // pred_check_branch
      %66 = sbr.rel (%p64) target = $region17
    $region16: #{tpu_custom_call.1} parent=1 // pred_region
      %v67 = vld [vmem:[#allocation2] sm:$0xff]
      %v68 = vld [vmem:[#allocation3] sm:$0xff]
      %v69 = vlog2.pop %v68
      %v70 = vmul.f32 %v69, 0.6931472
      %v71 = vadd.f32 %v67, %v70
      %v72 = vld [vmem:[#allocation4] sm:$0xff]
      %v73 = vsub.f32 %v71, %v72
      %v74 = vsel %vm50, %v73, 0.0
      %v75 = vrot.slane %v74, 4
      %v76 = vadd.f32 %v74, %v75
      %v77 = vrot.slane %v76, 2
      %v78 = vadd.f32 %v76, %v77
      %v79 = vrot.slane %v78, 1
      %v80 = vadd.f32 %v78, %v79
      %82 = vset.pattern.permute.xlu0 0
      %83 = vperm.xlu0 %82, %v80
      %v84 = vpop.permute.xlu0 %83
      %86 = vst [vmem:[#allocation5] sm:$0xff] %v84
    $region17: #{tpu_custom_call.1} parent=1 // pred_fallthru
      _
    // Predicated region
    $region18: #{tpu_custom_call.1} parent=1 // pred_check
      _
    $region19: #{tpu_custom_call.1} parent=1 // pred_check_branch
      %88 = sbr.rel (0) target = $region21
    $region20: #{tpu_custom_call.1} parent=1 // pred_region
      %s90 = ssub.s32 128, 128
      %91 = vsyncadd [#allocation6], %s90
      %s93 = sshll.u32 [#allocation5], 4
      %s94 = int_to_ptr.vmem [resolvable:$true] %s93
      %96 = dma.vmem_to_hbm [thread:$0]  %s94, 128, %s2, [#allocation6]
    $region21: #{tpu_custom_call.1} parent=1 // pred_fallthru
      _
    // Predicated region
    $region22: #{tpu_custom_call.1} parent=1 // pred_check
      _
    $region23: #{tpu_custom_call.1} parent=1 // pred_check_branch
      %98 = sbr.rel (0) target = $region25
    $region24: #{tpu_custom_call.1} parent=1 // pred_region
      %99 = dma.done [#allocation6], 128
    $region25: #{tpu_custom_call.1} parent=1 // pred_fallthru
      _
    %100 = vsyncpa [#allocation6], 1

</llo_original>
